<compile_context>
chip_gen: v7x
topology: tpu7x:2x2x1
jax: 0.10.0
libtpu: 0.0.40
codegen_flags: <defaults>
</compile_context>

<pallas_src>
import functools

import jax
import jax.numpy as jnp
from jax import lax
from jax.experimental import pallas as pl
from jax.experimental.pallas import tpu as pltpu

MARGIN = 0.5
_NORM_EPS = 1e-12                 # F.normalize eps
_NORM_EPS_SQ = _NORM_EPS * _NORM_EPS
_COS_EPS = 1e-8                   # F.cosine_similarity eps


def _round_up(x, m):
    return ((x + m - 1) // m) * m


def _cdiv(a, b):
    return (a + b - 1) // b


def _hw_params():
    """Returns (num_core_slices, vmem_limit_bytes, tile budget per input per buffer
    counted against the f32 working footprint)."""
    vmem_cap = 64 << 20
    try:
        vmem_cap = int(pltpu.get_tpu_info().vmem_capacity_bytes)
    except Exception:
        pass
    kind = ""
    try:
        kind = jax.devices()[0].device_kind.lower()
    except Exception:
        pass
    # Only v7x has 2 TensorCores per chip; v5e/v6e get a trivial size-1 axis.
    nc = 2 if "v7" in kind else 1
    if vmem_cap >= (128 << 20):            # v5e / v6e: 128 MiB physical VMEM
        return nc, 96 << 20, 8 << 20
    return nc, 48 << 20, 4 << 20           # v7x (64 MiB) or unknown: conservative


def _contrastive_loss_kernel(e1_ref, e2_ref, lbl_ref, out_ref, acc_ref, *, true_b):
    # Inner grid axis (1) is the batch-tile reduction; acc_ref is a (1,1) f32
    # running sum that persists across those steps for this core slice.
    @pl.when(pl.program_id(1) == 0)
    def _init():
        acc_ref[...] = jnp.zeros_like(acc_ref)

    # Native-dtype DMA; upcast in-kernel. Tile budgets leave headroom in case
    # Mosaic materializes the f32 copies instead of fusing the extends.
    e1 = e1_ref[...].astype(jnp.float32)          # (TB, D)
    e2 = e2_ref[...].astype(jnp.float32)          # (TB, D)
    labels = lbl_ref[...]                         # (TB, 1) f32

    # Three lane reductions over the (TB, D) tile; everything downstream is
    # (TB, 1) per-row math in f32. Normalized tensors are never materialized.
    s1 = jnp.sum(e1 * e1, axis=1, keepdims=True)
    s2 = jnp.sum(e2 * e2, axis=1, keepdims=True)
    d12 = jnp.sum(e1 * e2, axis=1, keepdims=True)

    # F.normalize(p=2, dim=1): x / max(||x||, 1e-12). rsqrt rides the EUP slot.
    inv1 = lax.rsqrt(jnp.maximum(s1, _NORM_EPS_SQ))
    inv2 = lax.rsqrt(jnp.maximum(s2, _NORM_EPS_SQ))
    n1 = jnp.sqrt(s1)
    n2 = jnp.sqrt(s2)

    # F.cosine_similarity of the normalized vectors:
    #   dot(e1n, e2n) / max(||e1n|| * ||e2n||, 1e-8)
    dot_n = d12 * (inv1 * inv2)
    m1m2 = (n1 * inv1) * (n2 * inv2)
    sim = dot_n / jnp.maximum(m1m2, _COS_EPS)

    pos = jnp.square(1.0 - sim)
    neg = jnp.square(jnp.maximum(sim - MARGIN, 0.0))
    per_row = labels * pos + (1.0 - labels) * neg          # (TB, 1)

    # Ragged-tail mask: rows at or past the true batch size contribute 0. The
    # edge / duplicated blocks may hold garbage in their out-of-bounds region
    # (no HBM zero-padding is done); the select discards it.
    tb = e1_ref.shape[0]
    blk = pl.program_id(0) * pl.num_programs(1) + pl.program_id(1)
    rows = blk * tb + lax.broadcasted_iota(jnp.int32, per_row.shape, 0)
    per_row = jnp.where(rows < true_b, per_row, 0.0)

    acc_ref[...] += jnp.sum(per_row, axis=0, keepdims=True)

    @pl.when(pl.program_id(1) == pl.num_programs(1) - 1)
    def _finalize():
        # Lane-dense (8, 128) output block per core slice; wrapper reads [0, 0].
        out_ref[...] = jnp.broadcast_to(acc_ref[...], out_ref.shape)


def contrastive_loss(embeddings1, embeddings2, labels, *, block_rows=None):
    """embeddings1/2: (B, D) float; labels: (B,) numeric -> scalar f32 mean loss."""
    b, d = embeddings1.shape
    itemsize = jnp.dtype(embeddings1.dtype).itemsize
    nc, vmem_limit, tile_budget_f32 = _hw_params()

    # Packed-sublane multiple for the native DMA dtype: 8 f32 / 16 bf16 / 32 int8.
    sub = max(8, 32 // itemsize)

    if block_rows is None:
        block_rows = tile_budget_f32 // max(d * 4, 1)
    tb = max(sub, (int(block_rows) // sub) * sub)
    tb = min(tb, 8192)
    # Never cover (much) more than the batch: avoids useless edge-tile DMA.
    tb = min(tb, _round_up(_cdiv(b, nc), sub))
    tb = max(sub, tb)

    blocks_total = _cdiv(b, tb)
    bps = _cdiv(blocks_total, nc)          # blocks per core slice
    last_block = blocks_total - 1

    labels2d = labels.astype(jnp.float32).reshape(b, 1)

    def row_map(c, i):
        # Clamp so duplicate / overhanging grid steps re-read the last real
        # block instead of going fully out of bounds; their rows are masked.
        return (jnp.minimum(c * bps + i, last_block), 0)

    kernel = functools.partial(_contrastive_loss_kernel, true_b=b)

    out = pl.pallas_call(
        kernel,
        out_shape=jax.ShapeDtypeStruct((nc * 8, 128), jnp.float32),
        grid_spec=pltpu.PrefetchScalarGridSpec(
            num_scalar_prefetch=0,
            grid=(nc, bps),
            in_specs=[
                pl.BlockSpec((tb, d), row_map),   # embeddings1 (native dtype on the wire)
                pl.BlockSpec((tb, d), row_map),   # embeddings2
                pl.BlockSpec((tb, 1), row_map),   # labels (f32)
            ],
            out_specs=pl.BlockSpec((8, 128), lambda c, i: (c, 0)),
            scratch_shapes=[pltpu.VMEM((1, 1), jnp.float32)],
        ),
        compiler_params=pltpu.CompilerParams(
            dimension_semantics=("parallel", "arbitrary"),
            vmem_limit_bytes=vmem_limit,
        ),
        cost_estimate=pl.CostEstimate(
            flops=6 * b * d + 20 * b,
            transcendentals=4 * b,
            bytes_accessed=2 * b * d * itemsize + b * 4 + nc * 8 * 128 * 4,
        ),
    )(embeddings1, embeddings2, labels2d)

    # One partial sum per core slice; combine and take the mean over the true B.
    partials = out.reshape(nc, 8, 128)[:, 0, 0]
    return jnp.sum(partials) / b


if __name__ == "__main__":
    key = jax.random.PRNGKey(0)
    k1, k2, k3 = jax.random.split(key, 3)

    # Pure-JAX reference (PyTorch-faithful formulation).
    def ref(e1, e2, lbl):
        n1 = jnp.linalg.norm(e1, axis=1, keepdims=True)
        n2 = jnp.linalg.norm(e2, axis=1, keepdims=True)
        a = e1 / jnp.maximum(n1, 1e-12)
        bb = e2 / jnp.maximum(n2, 1e-12)
        sim = jnp.sum(a * bb, axis=1) / jnp.maximum(
            jnp.linalg.norm(a, axis=1) * jnp.linalg.norm(bb, axis=1), 1e-8)
        l = lbl.astype(jnp.float32)
        return jnp.mean(l * (1 - sim) ** 2
                        + (1 - l) * jnp.maximum(sim - MARGIN, 0.0) ** 2)

    # Case 1: small batch, single tile.
    B, D = 8, 32
    e1 = jax.random.normal(k1, (B, D), dtype=jnp.float32)
    e2 = jax.random.normal(k2, (B, D), dtype=jnp.float32)
    labels = jax.random.bernoulli(k3, 0.5, (B,)).astype(jnp.int32)
    loss = contrastive_loss(e1, e2, labels)
    jax.block_until_ready(loss)
    expected = ref(e1, e2, labels)
    assert jnp.allclose(loss, expected, atol=3e-5, rtol=1e-4), (loss, expected)

    # Case 2: ragged batch, multiple tiles (exercises the running-sum
    # accumulator, index_map clamping, and the in-kernel tail mask).
    B2, D2 = 40, 128
    k4, k5, k6 = jax.random.split(k3, 3)
    f1 = jax.random.normal(k4, (B2, D2), dtype=jnp.float32)
    f2 = jax.random.normal(k5, (B2, D2), dtype=jnp.float32)
    lab2 = jax.random.bernoulli(k6, 0.5, (B2,)).astype(jnp.int32)
    loss2 = contrastive_loss(f1, f2, lab2, block_rows=8)
    jax.block_until_ready(loss2)
    expected2 = ref(f1, f2, lab2)
    assert jnp.allclose(loss2, expected2, atol=3e-5, rtol=1e-4), (loss2, expected2)

    # Case 3: bf16 inputs (exercises the 16-row sublane alignment and the
    # native-dtype DMA + in-kernel f32 upcast path).
    B3, D3 = 24, 64
    k7, k8, k9 = jax.random.split(k6, 3)
    g1 = jax.random.normal(k7, (B3, D3), dtype=jnp.float32).astype(jnp.bfloat16)
    g2 = jax.random.normal(k8, (B3, D3), dtype=jnp.float32).astype(jnp.bfloat16)
    lab3 = jax.random.bernoulli(k9, 0.5, (B3,)).astype(jnp.int32)
    loss3 = contrastive_loss(g1, g2, lab3)
    jax.block_until_ready(loss3)
    expected3 = ref(g1.astype(jnp.float32), g2.astype(jnp.float32), lab3)
    assert jnp.allclose(loss3, expected3, atol=3e-5, rtol=1e-4), (loss3, expected3)

    print("KERNEL_OK")
</pallas_src>

<mosaic_0001>
module attributes {stable_mosaic.version = 11 : i64} {
  func.func @_contrastive_loss_kernel(%arg0: i32, %arg1: i32, %arg2: memref<8x32xf32, #tpu.memory_space<vmem>>, %arg3: memref<8x32xf32, #tpu.memory_space<vmem>>, %arg4: memref<8x1xf32, #tpu.memory_space<vmem>>, %arg5: memref<8x128xf32, #tpu.memory_space<vmem>>, %arg6: memref<1x1xf32, #tpu.memory_space<vmem>>) attributes {dimension_semantics = [#tpu.dimension_semantics<parallel>, #tpu.dimension_semantics<arbitrary>], iteration_bounds = array<i64: 1, 1>, scalar_prefetch = 0 : i64, scratch_operands = 1 : i64, tpu.core_type = #tpu.core_type<tc>, window_params = [{transform_indices = @transform_0, window_bounds = array<i64: 8, 32>}, {transform_indices = @transform_1, window_bounds = array<i64: 8, 32>}, {transform_indices = @transform_2, window_bounds = array<i64: 8, 1>}, {transform_indices = @transform_3, window_bounds = array<i64: 8, 128>}]} {
    %c0_i32 = arith.constant 0 : i32
    %0 = arith.cmpi eq, %arg1, %c0_i32 : i32
    %1 = arith.extui %0 : i1 to i32
    %c0_i32_0 = arith.constant 0 : i32
    %2 = arith.cmpi ne, %1, %c0_i32_0 : i32
    scf.if %2 {
      %cst_24 = arith.constant 0.000000e+00 : f32
      %62 = vector.broadcast %cst_24 : f32 to vector<1x1xf32>
      %c0_25 = arith.constant 0 : index
      %c0_26 = arith.constant 0 : index
      %63 = vector.load %arg6[%c0_25, %c0_26] : memref<1x1xf32, #tpu.memory_space<vmem>>, vector<1x1xf32>
      tpu.vector_store %arg6[%c0_25, %c0_26], %62 {strides = array<i32>} : memref<1x1xf32, #tpu.memory_space<vmem>>, vector<1x1xf32>,
    } else {
    }
    %c0 = arith.constant 0 : index
    %c0_1 = arith.constant 0 : index
    %3 = vector.load %arg2[%c0, %c0_1] : memref<8x32xf32, #tpu.memory_space<vmem>>, vector<8x32xf32>
    %c0_2 = arith.constant 0 : index
    %c0_3 = arith.constant 0 : index
    %4 = vector.load %arg3[%c0_2, %c0_3] : memref<8x32xf32, #tpu.memory_space<vmem>>, vector<8x32xf32>
    %c0_4 = arith.constant 0 : index
    %c0_5 = arith.constant 0 : index
    %5 = vector.load %arg4[%c0_4, %c0_5] : memref<8x1xf32, #tpu.memory_space<vmem>>, vector<8x1xf32>
    %6 = arith.mulf %3, %3 : vector<8x32xf32>
    %cst = arith.constant dense<0.000000e+00> : vector<8xf32>
    %7 = vector.multi_reduction <add>, %6, %cst [1] : vector<8x32xf32> to vector<8xf32>
    %8 = vector.shape_cast %7 : vector<8xf32> to vector<8x1xf32>
    %9 = arith.mulf %4, %4 : vector<8x32xf32>
    %cst_6 = arith.constant dense<0.000000e+00> : vector<8xf32>
    %10 = vector.multi_reduction <add>, %9, %cst_6 [1] : vector<8x32xf32> to vector<8xf32>
    %11 = vector.shape_cast %10 : vector<8xf32> to vector<8x1xf32>
    %12 = arith.mulf %3, %4 : vector<8x32xf32>
    %cst_7 = arith.constant dense<0.000000e+00> : vector<8xf32>
    %13 = vector.multi_reduction <add>, %12, %cst_7 [1] : vector<8x32xf32> to vector<8xf32>
    %14 = vector.shape_cast %13 : vector<8xf32> to vector<8x1xf32>
    %cst_8 = arith.constant 1.000000e-24 : f32
    %15 = vector.broadcast %cst_8 : f32 to vector<8x1xf32>
    %16 = arith.maximumf %8, %15 : vector<8x1xf32>
    %17 = math.rsqrt %16 : vector<8x1xf32>
    %cst_9 = arith.constant 1.000000e-24 : f32
    %18 = vector.broadcast %cst_9 : f32 to vector<8x1xf32>
    %19 = arith.maximumf %11, %18 : vector<8x1xf32>
    %20 = math.rsqrt %19 : vector<8x1xf32>
    %21 = math.sqrt %8 : vector<8x1xf32>
    %22 = math.sqrt %11 : vector<8x1xf32>
    %23 = arith.mulf %17, %20 : vector<8x1xf32>
    %24 = arith.mulf %14, %23 : vector<8x1xf32>
    %25 = arith.mulf %21, %17 : vector<8x1xf32>
    %26 = arith.mulf %22, %20 : vector<8x1xf32>
    %27 = arith.mulf %25, %26 : vector<8x1xf32>
    %cst_10 = arith.constant 9.99999993E-9 : f32
    %28 = vector.broadcast %cst_10 : f32 to vector<8x1xf32>
    %29 = arith.maximumf %27, %28 : vector<8x1xf32>
    %30 = arith.divf %24, %29 : vector<8x1xf32>
    %cst_11 = arith.constant 1.000000e+00 : f32
    %31 = vector.broadcast %cst_11 : f32 to vector<8x1xf32>
    %32 = arith.subf %31, %30 : vector<8x1xf32>
    %33 = arith.mulf %32, %32 : vector<8x1xf32>
    %cst_12 = arith.constant 5.000000e-01 : f32
    %34 = vector.broadcast %cst_12 : f32 to vector<8x1xf32>
    %35 = arith.subf %30, %34 : vector<8x1xf32>
    %cst_13 = arith.constant 0.000000e+00 : f32
    %36 = vector.broadcast %cst_13 : f32 to vector<8x1xf32>
    %37 = arith.maximumf %35, %36 : vector<8x1xf32>
    %38 = arith.mulf %37, %37 : vector<8x1xf32>
    %39 = arith.mulf %5, %33 : vector<8x1xf32>
    %cst_14 = arith.constant 1.000000e+00 : f32
    %40 = vector.broadcast %cst_14 : f32 to vector<8x1xf32>
    %41 = arith.subf %40, %5 : vector<8x1xf32>
    %42 = arith.mulf %41, %38 : vector<8x1xf32>
    %43 = arith.addf %39, %42 : vector<8x1xf32>
    %c1_i32 = arith.constant 1 : i32
    %44 = arith.muli %arg0, %c1_i32 : i32
    %45 = arith.addi %44, %arg1 : i32
    %c8_i32 = arith.constant 8 : i32
    %46 = arith.muli %45, %c8_i32 : i32
    %47 = tpu.iota {dimensions = array<i32: 0>} : vector<8x1xi32>
    %48 = vector.broadcast %46 : i32 to vector<8x1xi32>
    %49 = arith.addi %48, %47 : vector<8x1xi32>
    %c8_i32_15 = arith.constant 8 : i32
    %50 = vector.broadcast %c8_i32_15 : i32 to vector<8x1xi32>
    %51 = arith.cmpi slt, %49, %50 : vector<8x1xi32>
    %cst_16 = arith.constant 0.000000e+00 : f32
    %52 = vector.broadcast %cst_16 : f32 to vector<8x1xf32>
    %53 = arith.select %51, %43, %52 : vector<8x1xi1>, vector<8x1xf32>
    %c0_17 = arith.constant 0 : index
    %c0_18 = arith.constant 0 : index
    %54 = vector.load %arg6[%c0_17, %c0_18] : memref<1x1xf32, #tpu.memory_space<vmem>>, vector<1x1xf32>
    %cst_19 = arith.constant dense<0.000000e+00> : vector<1xf32>
    %55 = vector.multi_reduction <add>, %53, %cst_19 [0] : vector<8x1xf32> to vector<1xf32>
    %56 = vector.shape_cast %55 : vector<1xf32> to vector<1x1xf32>
    %57 = arith.addf %54, %56 : vector<1x1xf32>
    %c0_20 = arith.constant 0 : index
    %c0_21 = arith.constant 0 : index
    %58 = vector.load %arg6[%c0_20, %c0_21] : memref<1x1xf32, #tpu.memory_space<vmem>>, vector<1x1xf32>
    tpu.vector_store %arg6[%c0_20, %c0_21], %57 {strides = array<i32>} : memref<1x1xf32, #tpu.memory_space<vmem>>, vector<1x1xf32>,
    %c0_i32_22 = arith.constant 0 : i32
    %59 = arith.cmpi eq, %arg1, %c0_i32_22 : i32
    %60 = arith.extui %59 : i1 to i32
    %c0_i32_23 = arith.constant 0 : i32
    %61 = arith.cmpi ne, %60, %c0_i32_23 : i32
    scf.if %61 {
      %c0_24 = arith.constant 0 : index
      %c0_25 = arith.constant 0 : index
      %62 = vector.load %arg6[%c0_24, %c0_25] : memref<1x1xf32, #tpu.memory_space<vmem>>, vector<1x1xf32>
      %63 = vector.shape_cast %62 : vector<1x1xf32> to vector<1x1xf32>
      %64 = vector.broadcast %63 : vector<1x1xf32> to vector<8x128xf32>
      %c0_26 = arith.constant 0 : index
      %c0_27 = arith.constant 0 : index
      %65 = vector.load %arg5[%c0_26, %c0_27] : memref<8x128xf32, #tpu.memory_space<vmem>>, vector<8x128xf32>
      tpu.vector_store %arg5[%c0_26, %c0_27], %64 {strides = array<i32>} : memref<8x128xf32, #tpu.memory_space<vmem>>, vector<8x128xf32>,
    } else {
    }
    return
  }
  func.func @transform_0(%arg0: i32, %arg1: i32) -> (i32, i32) {
    %c1_i32 = arith.constant 1 : i32
    %0 = arith.muli %arg0, %c1_i32 : i32
    %1 = arith.addi %0, %arg1 : i32
    %c0_i32 = arith.constant 0 : i32
    %2 = arith.minsi %1, %c0_i32 : i32
    %c0_i32_0 = arith.constant 0 : i32
    %c0_i32_1 = arith.constant 0 : i32
    return %2, %c0_i32_0 : i32, i32
  }
  func.func @transform_1(%arg0: i32, %arg1: i32) -> (i32, i32) {
    %c1_i32 = arith.constant 1 : i32
    %0 = arith.muli %arg0, %c1_i32 : i32
    %1 = arith.addi %0, %arg1 : i32
    %c0_i32 = arith.constant 0 : i32
    %2 = arith.minsi %1, %c0_i32 : i32
    %c0_i32_0 = arith.constant 0 : i32
    %c0_i32_1 = arith.constant 0 : i32
    return %2, %c0_i32_0 : i32, i32
  }
  func.func @transform_2(%arg0: i32, %arg1: i32) -> (i32, i32) {
    %c1_i32 = arith.constant 1 : i32
    %0 = arith.muli %arg0, %c1_i32 : i32
    %1 = arith.addi %0, %arg1 : i32
    %c0_i32 = arith.constant 0 : i32
    %2 = arith.minsi %1, %c0_i32 : i32
    %c0_i32_0 = arith.constant 0 : i32
    %c0_i32_1 = arith.constant 0 : i32
    return %2, %c0_i32_0 : i32, i32
  }
  func.func @transform_3(%arg0: i32, %arg1: i32) -> (i32, i32) {
    %c0_i32 = arith.constant 0 : i32
    %c0_i32_0 = arith.constant 0 : i32
    return %arg0, %c0_i32 : i32, i32
  }
}

</mosaic_0001>

<llo_original>
// kernel: tpu_custom_call.1
$region0: #{tpu_custom_call.1}
  #allocation0 [shape = 'u32[]', space=smem, size = 0x4, offset = 0x4, fixed_abs, tag = 'smem constant byte address 0x4 - core index']
  #allocation1 [shape = 'u32[144,128]{1,0:T(1,128)}', space=vmem, size = 0x12000, scoped, tag = 'internal scratch']
  #allocation2 [shape = 'f32[1,1]{1,0:T(1,128)}', space=vmem, size = 0x200, scoped, tag = 'scratch operand']
  %s0 = inlined_call_operand.vmem [shape: f32[8,32], index: 0, kind: input, shape index: {}]
  %s1 = inlined_call_operand.hbm [shape: f32[8,32], index: 1, kind: input, shape index: {}]
  %s2 = inlined_call_operand.vmem [shape: f32[8,1], index: 2, kind: input, shape index: {}]
  %s3 = inlined_call_operand.hbm [shape: f32[8,128], index: 3, kind: output, shape index: {}]
  %s4 = sld [smem:[#allocation0]]
  $region34: #{tpu_custom_call.1} parent=0
    _
  %s6 = ssub.s32 1, %s4
  %s7 = scalar_select 0, %s6, %s4
  $region1: #{tpu_custom_call.1} parent=0
    #allocation3 [shape = 'u8[4096]{0}', space=vmem, size = 0x1000, scoped, tag = 'input window, operand 1, single buffered']
    #allocation4 [shape = 's32[1]{0}', space=sflag, size = 0x4, scoped, tag = 'scoped memory for tpu_custom_call.1']
    #allocation5 [shape = 's32[1]{0}', space=sflag, size = 0x4, scoped, tag = 'scoped memory for tpu_custom_call.1']
    #allocation6 [shape = 'u8[4096]{0}', space=vmem, size = 0x1000, scoped, tag = 'output window, operand 0, single buffered']
    %8 = vsyncpa [#allocation4], 0
    %9 = vsyncpa [#allocation5], 0
    // Predicated region
    $region2: #{tpu_custom_call.1} parent=1 // pred_check
      _
    $region3: #{tpu_custom_call.1} parent=1 // pred_check_branch
      %11 = sbr.rel (0) target = $region5
    $region4: #{tpu_custom_call.1} parent=1 // pred_region
      %s12 = sadd.s32 0, 0
      %p13 = scmp.lt.s32.totalorder %s12, 0
      %s14 = scalar_select %p13, %s12, 0
      %p15 = scmp.lt.s32.totalorder %s14, 0
      %s16 = scalar_select %p15, %s14, 0
      %s17 = smul.addr %s16, 8
      %s18 = scalar_lea.vmem %s0, %s17
      %s19 = sadd.s32 0, 0
      %p20 = scmp.lt.s32.totalorder %s19, 0
      %s21 = scalar_select %p20, %s19, 0
    $region5: #{tpu_custom_call.1} parent=1 // pred_fallthru
      _
    // Predicated region
    $region6: #{tpu_custom_call.1} parent=1 // pred_check
      _
    $region7: #{tpu_custom_call.1} parent=1 // pred_check_branch
      %23 = sbr.rel (0) target = $region9
    $region8: #{tpu_custom_call.1} parent=1 // pred_region
      %s24 = sadd.s32 0, 0
      %p25 = scmp.lt.s32.totalorder %s24, 0
      %s26 = scalar_select %p25, %s24, 0
      %s28 = ssub.s32 128, 128
      %29 = vsyncadd [#allocation4], %s28
      %s30 = smul.addr %s26, 128
      %s31 = scalar_lea.hbm %s1, %s30
      %s33 = sshll.u32 [#allocation3], 4
      %s34 = int_to_ptr.vmem [resolvable:$true] %s33
      %36 = dma.hbm_to_vmem [thread:$0]  %s31, 128, %s34, [#allocation4]
    $region9: #{tpu_custom_call.1} parent=1 // pred_fallthru
      _
    // Predicated region
    $region10: #{tpu_custom_call.1} parent=1 // pred_check
      _
    $region11: #{tpu_custom_call.1} parent=1 // pred_check_branch
      %38 = sbr.rel (0) target = $region13
    $region12: #{tpu_custom_call.1} parent=1 // pred_region
      %s39 = sadd.s32 0, 0
      %p40 = scmp.lt.s32.totalorder %s39, 0
      %s41 = scalar_select %p40, %s39, 0
      %p42 = scmp.lt.s32.totalorder %s41, 0
      %s43 = scalar_select %p42, %s41, 0
      %s44 = smul.addr %s43, 8
      %s45 = scalar_lea.vmem %s2, %s44
      %s46 = sadd.s32 0, 0
      %p47 = scmp.lt.s32.totalorder %s46, 0
      %s48 = scalar_select %p47, %s46, 0
    $region13: #{tpu_custom_call.1} parent=1 // pred_fallthru
      _
    // Predicated region
    $region14: #{tpu_custom_call.1} parent=1 // pred_check
      _
    $region15: #{tpu_custom_call.1} parent=1 // pred_check_branch
      %50 = sbr.rel (0) target = $region17
    $region16: #{tpu_custom_call.1} parent=1 // pred_region
      %51 = dma.done [#allocation4], 128
    $region17: #{tpu_custom_call.1} parent=1 // pred_fallthru
      _
    %s52 = sadd.s32 0, 0
    %p53 = scmp.lt.s32.totalorder %s52, 0
    %s54 = scalar_select %p53, %s52, 0
    %p55 = scmp.lt.s32.totalorder %s54, 0
    %s56 = scalar_select %p55, %s54, 0
    %s57 = smul.addr %s56, 8
    %s58 = scalar_lea.vmem %s0, %s57
    %s59 = sadd.s32 0, 0
    %p60 = scmp.lt.s32.totalorder %s59, 0
    %s61 = scalar_select %p60, %s59, 0
    %p62 = scmp.lt.s32.totalorder %s61, 0
    %s63 = scalar_select %p62, %s61, 0
    %s64 = smul.addr %s63, 8
    %s65 = scalar_lea.vmem %s2, %s64
    %s66 = sadd.s32 0, 0
    %p67 = scmp.lt.s32.totalorder %s66, 0
    %s68 = scalar_select %p67, %s66, 0
    %p69 = scmp.lt.s32.totalorder %s68, 0
    %s70 = scalar_select %p69, %s68, 0
    %s71 = smul.addr %s70, 8
    %s72 = scalar_lea.vmem %s0, %s71
    %s73 = sadd.s32 0, 0
    %p74 = scmp.lt.s32.totalorder %s73, 0
    %s75 = scalar_select %p74, %s73, 0
    %s76 = sadd.s32 0, 0
    %p77 = scmp.lt.s32.totalorder %s76, 0
    %s78 = scalar_select %p77, %s76, 0
    %s79 = sadd.s32 0, 0
    %p80 = scmp.lt.s32.totalorder %s79, 0
    %s81 = scalar_select %p80, %s79, 0
    %p82 = scmp.lt.s32.totalorder %s81, 0
    %s83 = scalar_select %p82, %s81, 0
    %s84 = smul.addr %s83, 8
    %s85 = scalar_lea.vmem %s2, %s84
    %s86 = sadd.s32 0, 0
    %p87 = scmp.lt.s32.totalorder %s86, 0
    %s88 = scalar_select %p87, %s86, 0
    %p89 = scmp.eq.s32.totalorder 0, 0
    // Predicated region
    $region18: #{tpu_custom_call.1} parent=1 // pred_check
      %p90 = pneg %p89
    $region19: #{tpu_custom_call.1} parent=1 // pred_check_branch
      %92 = sbr.rel (%p90) target = $region21
    $region20: #{tpu_custom_call.1} parent=1 // pred_region
      %vm93 = vcmask 0
      %94 = vst.msk [vmem:[#allocation2] sm:$0x1] %vm93, 0.0
    $region21: #{tpu_custom_call.1} parent=1 // pred_fallthru
      _
    %v95 = vld [vmem:[%s72] sm:$0xff]
    %v96 = vld [vmem:[#allocation3] sm:$0xff]
    %v97 = vld [vmem:[%s85] sm:$0xff]
    %v98 = vmul.f32 %v95, %v95
    %vm99 = vcmask 261120
    %v100 = vsel %vm99, %v98, 0.0
    %101 = vadd.xlane.f32.xlu0 %v100
    %v102 = vpop.xlane.xlu0 %101
    %v103 = vmul.f32 %v96, %v96
    %v104 = vsel %vm99, %v103, 0.0
    %105 = vadd.xlane.f32.xlu0 %v104
    %v106 = vpop.xlane.xlu0 %105
    %v107 = vmul.f32 %v95, %v96
    %v108 = vsel %vm99, %v107, 0.0
    %109 = vadd.xlane.f32.xlu0 %v108
    %v110 = vpop.xlane.xlu0 %109
    %v111 = vmax.f32 %v102, 1e-24
    %v112 = vrsqrt.pop %v111
    %v113 = vmax.f32 %v106, 1e-24
    %v114 = vrsqrt.pop %v113
    %v115 = vrsqrt.pop %v102
    %v116 = vmul.f32 %v102, %v115
    %vm117 = vcmp.eq.f32.partialorder %v102, inf
    %v118 = vsel %vm117, %v102, %v116
    %vm119 = vcmp.eq.f32.partialorder %v102, 0.0
    %v120 = vand.u32 %v102, 2147483648
    %v121 = vsel %vm119, %v120, %v118
    %v122 = vrsqrt.pop %v106
    %v123 = vmul.f32 %v106, %v122
    %vm124 = vcmp.eq.f32.partialorder %v106, inf
    %v125 = vsel %vm124, %v106, %v123
    %vm126 = vcmp.eq.f32.partialorder %v106, 0.0
    %v127 = vand.u32 %v106, 2147483648
    %v128 = vsel %vm126, %v127, %v125
    %v129 = vmul.f32 %v112, %v114
    %v130 = vmul.f32 %v110, %v129
    %v131 = vmul.f32 %v121, %v112
    %v132 = vmul.f32 %v128, %v114
    %v133 = vmul.f32 %v131, %v132
    %v134 = vmax.f32 %v133, 1e-08
    %v135 = vrcp.pop %v134
    %v136 = vmul.f32 %v130, %v135
    %v137 = vsub.f32 1.0, %v136
    %v138 = vmul.f32 %v137, %v137
    %v139 = vsub.f32 %v136, 0.5
    %v140 = vmax.f32 %v139, 0.0
    %v141 = vmul.f32 %v140, %v140
    %v142 = vmul.f32 %v97, %v138
    %v143 = vsub.f32 1.0, %v97
    %v144 = vmul.f32 %v143, %v141
    %v145 = vadd.f32 %v142, %v144
    %s146 = sadd.s32 0, 0
    %s147 = smul.u32 %s146, 8
    %v148 = vlaneseq
    %v149 = vshrl.u32 %v148, 7
    %v150 = vstv %s147
    %v151 = vadd.s32 %v150, %v149
    %vm152 = vcmp.lt.s32.totalorder %v151, 8
    %v153 = vsel %vm152, %v145, 0.0
    %v154 = vld [vmem:[#allocation2] sm:$0x1]
    %vm155 = vcmask 7168
    %v156 = vsel %vm155, %v153, 0.0
    %v157 = vrot.slane %v156, 4
    %v158 = vadd.f32 %v156, %v157
    %v159 = vrot.slane %v158, 2
    %v160 = vadd.f32 %v158, %v159
    %v161 = vrot.slane %v160, 1
    %v162 = vadd.f32 %v160, %v161
    %v163 = vadd.f32 %v154, %v162
    %vm164 = vcmask 0
    %165 = vst.msk [vmem:[#allocation2] sm:$0x1] %vm164, %v163
    // Predicated region
    $region22: #{tpu_custom_call.1} parent=1 // pred_check
      %p166 = pneg %p89
    $region23: #{tpu_custom_call.1} parent=1 // pred_check_branch
      %168 = sbr.rel (%p166) target = $region25
    $region24: #{tpu_custom_call.1} parent=1 // pred_region
      %v169 = vld [vmem:[#allocation2] sm:$0x1]
      %v171 = vlaneseq
      %v172 = vshrl.u32 %v171, 7
      %v173 = vsub.s32 0, %v172
      %v174 = vrot.slane %v169, %v173
      %175 = vset.pattern.permute.xlu0 0
      %176 = vperm.xlu0 %175, %v174
      %v177 = vpop.permute.xlu0 %176
      %179 = vst [vmem:[#allocation6] sm:$0xff] %v177
    $region25: #{tpu_custom_call.1} parent=1 // pred_fallthru
      _
    // Predicated region
    $region26: #{tpu_custom_call.1} parent=1 // pred_check
      _
    $region27: #{tpu_custom_call.1} parent=1 // pred_check_branch
      %181 = sbr.rel (0) target = $region29
    $region28: #{tpu_custom_call.1} parent=1 // pred_region
      %s183 = ssub.s32 128, 128
      %184 = vsyncadd [#allocation5], %s183
      %s186 = sshll.u32 [#allocation6], 4
      %s187 = int_to_ptr.vmem [resolvable:$true] %s186
      %189 = dma.vmem_to_hbm [thread:$0]  %s187, 128, %s3, [#allocation5]
    $region29: #{tpu_custom_call.1} parent=1 // pred_fallthru
      _
    // Predicated region
    $region30: #{tpu_custom_call.1} parent=1 // pred_check
      _
    $region31: #{tpu_custom_call.1} parent=1 // pred_check_branch
      %191 = sbr.rel (0) target = $region33
    $region32: #{tpu_custom_call.1} parent=1 // pred_region
      %192 = dma.done [#allocation5], 128
    $region33: #{tpu_custom_call.1} parent=1 // pred_fallthru
      _
    %193 = vsyncpa [#allocation4], 1
    %194 = vsyncpa [#allocation5], 1

</llo_original>
